<compile_context>
chip_gen: v6e
topology: v6e:2x2x1
jax: 0.10.0
libtpu: 0.0.40
codegen_flags: <defaults>
</compile_context>

<pallas_src>
import functools

import jax
import jax.numpy as jnp
from jax import lax
from jax.experimental import pallas as pl
from jax.experimental.pallas import tpu as pltpu


def _round_up(x: int, m: int) -> int:
    return ((x + m - 1) // m) * m


def _linear_kernel(x_ref, w_ref, b_ref, o_ref, acc_ref):
    # x_ref:   (tm, tk)  activations tile
    # w_ref:   (tn, tk)  weight tile in PyTorch (out, in) layout
    # b_ref:   (1,  tn)  bias tile
    # o_ref:   (tm, tn)  output tile
    # acc_ref: (tm, tn)  f32 accumulator (VMEM scratch, resident across K)
    k = pl.program_id(2)

    @pl.when(k == 0)
    def _():
        # Start the accumulator at the (broadcast) bias -> no epilogue add.
        acc_ref[...] = jnp.broadcast_to(
            b_ref[...].astype(jnp.float32), acc_ref.shape)

    # Contract x (tm, tk) with w (tn, tk) on their last dims -> (tm, tn).
    acc_ref[...] += lax.dot_general(
        x_ref[...], w_ref[...],
        dimension_numbers=(((1,), (1,)), ((), ())),
        preferred_element_type=jnp.float32)

    @pl.when(k == pl.num_programs(2) - 1)
    def _():
        o_ref[...] = acc_ref[...].astype(o_ref.dtype)


@functools.partial(jax.jit, static_argnames=("tm", "tn", "tk"))
def linear_forward(x, weight, bias, *, tm=256, tn=256, tk=512):
    """y = x @ weight.T + bias, matching torch.nn.Linear."""
    B, F = x.shape
    O = weight.shape[0]

    # Minimum TPU-friendly padded dims: sublane multiple for batch,
    # lane (128) multiples for the contraction and output feature dims.
    Mp = _round_up(B, 8)
    Op = _round_up(O, 128)
    Fp = _round_up(F, 128)

    # Clamp requested tiles to the problem, keep them (8,128)-aligned.
    tm = _round_up(min(tm, Mp), 8)
    tn = _round_up(min(tn, Op), 128)
    tk = _round_up(min(tk, Fp), 128)

    # Pad arrays up to whole tiles (zero padding contributes 0 to the dot).
    Mp = _round_up(Mp, tm)
    Op = _round_up(Op, tn)
    Fp = _round_up(Fp, tk)
    xp = jnp.pad(x, ((0, Mp - B), (0, Fp - F)))
    wp = jnp.pad(weight, ((0, Op - O), (0, Fp - F)))
    bp = jnp.pad(bias, (0, Op - O)).reshape(1, Op)

    grid = (Mp // tm, Op // tn, Fp // tk)

    cost = pl.CostEstimate(
        flops=2 * Mp * Fp * Op,
        transcendentals=0,
        bytes_accessed=(xp.size + wp.size + bp.size + Mp * Op) * x.dtype.itemsize,
    )

    out = pl.pallas_call(
        _linear_kernel,
        out_shape=jax.ShapeDtypeStruct((Mp, Op), x.dtype),
        grid_spec=pltpu.PrefetchScalarGridSpec(
            num_scalar_prefetch=0,
            grid=grid,
            in_specs=[
                pl.BlockSpec((tm, tk), lambda i, j, k: (i, k)),   # x
                pl.BlockSpec((tn, tk), lambda i, j, k: (j, k)),   # weight (O, F)
                pl.BlockSpec((1, tn), lambda i, j, k: (0, j)),    # bias
            ],
            out_specs=pl.BlockSpec((tm, tn), lambda i, j, k: (i, j)),
            scratch_shapes=[pltpu.VMEM((tm, tn), jnp.float32)],
        ),
        compiler_params=pltpu.CompilerParams(
            dimension_semantics=("parallel", "parallel", "arbitrary"),
            vmem_limit_bytes=48 * 1024 * 1024,  # fits v7x's 64 MiB with headroom
        ),
        cost_estimate=cost,
    )(xp, wp, bp)

    return out[:B, :O]


if __name__ == "__main__":
    key = jax.random.PRNGKey(0)
    k_x, k_w, k_b = jax.random.split(key, 3)

    batch = 8
    input_size = 16       # X_train.shape[1]
    output_size = 1       # as in the module

    x = jax.random.normal(k_x, (batch, input_size), dtype=jnp.float32)
    # Deterministic parameter init (mimics nn.Linear's uniform(-1/sqrt(in), 1/sqrt(in)))
    bound = 1.0 / (input_size ** 0.5)
    weight = jax.random.uniform(k_w, (output_size, input_size),
                                minval=-bound, maxval=bound, dtype=jnp.float32)
    bias = jax.random.uniform(k_b, (output_size,),
                              minval=-bound, maxval=bound, dtype=jnp.float32)

    out = linear_forward(x, weight, bias)
    jax.block_until_ready(out)

    # Reference check against plain JAX (same math as torch.nn.Linear)
    ref = x @ weight.T + bias
    assert out.shape == (batch, output_size)
    assert jnp.allclose(out, ref, atol=1e-5, rtol=1e-5)

    # Second check at a larger, non-tile-multiple shape to exercise tiling/padding.
    k_x2, k_w2, k_b2 = jax.random.split(jax.random.PRNGKey(1), 3)
    B2, F2, O2 = 200, 300, 70
    x2 = jax.random.normal(k_x2, (B2, F2), dtype=jnp.float32)
    w2 = jax.random.normal(k_w2, (O2, F2), dtype=jnp.float32) * 0.05
    b2 = jax.random.normal(k_b2, (O2,), dtype=jnp.float32)
    out2 = linear_forward(x2, w2, b2)
    jax.block_until_ready(out2)
    ref2 = x2 @ w2.T + b2
    assert jnp.allclose(out2, ref2, atol=1e-4, rtol=1e-4)

    # Third check with a multi-tile K reduction to exercise the accumulator path.
    k_x3, k_w3, k_b3 = jax.random.split(jax.random.PRNGKey(2), 3)
    B3, F3, O3 = 64, 1024, 256
    x3 = jax.random.normal(k_x3, (B3, F3), dtype=jnp.float32)
    w3 = jax.random.normal(k_w3, (O3, F3), dtype=jnp.float32) * 0.02
    b3 = jax.random.normal(k_b3, (O3,), dtype=jnp.float32)
    out3 = linear_forward(x3, w3, b3, tk=512)
    jax.block_until_ready(out3)
    ref3 = x3 @ w3.T + b3
    assert jnp.allclose(out3, ref3, atol=1e-3, rtol=1e-3)

    print("KERNEL_OK")
</pallas_src>

<mosaic_0001>
module attributes {stable_mosaic.version = 11 : i64} {
  func.func @_linear_kernel(%arg0: i32, %arg1: i32, %arg2: i32, %arg3: memref<8x128xf32, #tpu.memory_space<vmem>>, %arg4: memref<128x128xf32, #tpu.memory_space<vmem>>, %arg5: memref<1x128xf32, #tpu.memory_space<vmem>>, %arg6: memref<8x128xf32, #tpu.memory_space<vmem>>, %arg7: memref<8x128xf32, #tpu.memory_space<vmem>>) attributes {dimension_semantics = [#tpu.dimension_semantics<parallel>, #tpu.dimension_semantics<parallel>, #tpu.dimension_semantics<arbitrary>], iteration_bounds = array<i64: 1, 1, 1>, scalar_prefetch = 0 : i64, scratch_operands = 1 : i64, tpu.core_type = #tpu.core_type<tc>, window_params = [{transform_indices = @transform_0, window_bounds = array<i64: 8, 128>}, {transform_indices = @transform_1, window_bounds = array<i64: 128, 128>}, {transform_indices = @transform_2, window_bounds = array<i64: 1, 128>}, {transform_indices = @transform_3, window_bounds = array<i64: 8, 128>}]} {
    %c0_i32 = arith.constant 0 : i32
    %0 = arith.cmpi eq, %arg2, %c0_i32 : i32
    %1 = arith.extui %0 : i1 to i32
    %c0_i32_0 = arith.constant 0 : i32
    %2 = arith.cmpi ne, %1, %c0_i32_0 : i32
    scf.if %2 {
      %c0_10 = arith.constant 0 : index
      %c0_11 = arith.constant 0 : index
      %12 = vector.load %arg5[%c0_10, %c0_11] : memref<1x128xf32, #tpu.memory_space<vmem>>, vector<1x128xf32>
      %13 = vector.shape_cast %12 : vector<1x128xf32> to vector<1x128xf32>
      %14 = vector.broadcast %13 : vector<1x128xf32> to vector<8x128xf32>
      %c0_12 = arith.constant 0 : index
      %c0_13 = arith.constant 0 : index
      %15 = vector.load %arg7[%c0_12, %c0_13] : memref<8x128xf32, #tpu.memory_space<vmem>>, vector<8x128xf32>
      tpu.vector_store %arg7[%c0_12, %c0_13], %14 {strides = array<i32>} : memref<8x128xf32, #tpu.memory_space<vmem>>, vector<8x128xf32>,
    } else {
    }
    %c0 = arith.constant 0 : index
    %c0_1 = arith.constant 0 : index
    %3 = vector.load %arg7[%c0, %c0_1] : memref<8x128xf32, #tpu.memory_space<vmem>>, vector<8x128xf32>
    %c0_2 = arith.constant 0 : index
    %c0_3 = arith.constant 0 : index
    %4 = vector.load %arg3[%c0_2, %c0_3] : memref<8x128xf32, #tpu.memory_space<vmem>>, vector<8x128xf32>
    %c0_4 = arith.constant 0 : index
    %c0_5 = arith.constant 0 : index
    %5 = vector.load %arg4[%c0_4, %c0_5] : memref<128x128xf32, #tpu.memory_space<vmem>>, vector<128x128xf32>
    %cst = arith.constant dense<0.000000e+00> : vector<8x128xf32>
    %6 = tpu.matmul %4, %5, %cst {dimension_numbers = #tpu.dot_dimension_numbers<[1], [1], [0], [0], [0, 0, 1, 0], [], []>} : vector<8x128xf32>, vector<128x128xf32>, vector<8x128xf32> -> vector<8x128xf32>
    %7 = arith.addf %3, %6 : vector<8x128xf32>
    %c0_6 = arith.constant 0 : index
    %c0_7 = arith.constant 0 : index
    %8 = vector.load %arg7[%c0_6, %c0_7] : memref<8x128xf32, #tpu.memory_space<vmem>>, vector<8x128xf32>
    tpu.vector_store %arg7[%c0_6, %c0_7], %7 {strides = array<i32>} : memref<8x128xf32, #tpu.memory_space<vmem>>, vector<8x128xf32>,
    %c0_i32_8 = arith.constant 0 : i32
    %9 = arith.cmpi eq, %arg2, %c0_i32_8 : i32
    %10 = arith.extui %9 : i1 to i32
    %c0_i32_9 = arith.constant 0 : i32
    %11 = arith.cmpi ne, %10, %c0_i32_9 : i32
    scf.if %11 {
      %c0_10 = arith.constant 0 : index
      %c0_11 = arith.constant 0 : index
      %12 = vector.load %arg7[%c0_10, %c0_11] : memref<8x128xf32, #tpu.memory_space<vmem>>, vector<8x128xf32>
      %c0_12 = arith.constant 0 : index
      %c0_13 = arith.constant 0 : index
      %13 = vector.load %arg6[%c0_12, %c0_13] : memref<8x128xf32, #tpu.memory_space<vmem>>, vector<8x128xf32>
      tpu.vector_store %arg6[%c0_12, %c0_13], %12 {strides = array<i32>} : memref<8x128xf32, #tpu.memory_space<vmem>>, vector<8x128xf32>,
    } else {
    }
    return
  }
  func.func @transform_0(%arg0: i32, %arg1: i32, %arg2: i32) -> (i32, i32) {
    %c0_i32 = arith.constant 0 : i32
    return %arg0, %arg2 : i32, i32
  }
  func.func @transform_1(%arg0: i32, %arg1: i32, %arg2: i32) -> (i32, i32) {
    %c0_i32 = arith.constant 0 : i32
    return %arg1, %arg2 : i32, i32
  }
  func.func @transform_2(%arg0: i32, %arg1: i32, %arg2: i32) -> (i32, i32) {
    %c0_i32 = arith.constant 0 : i32
    %c0_i32_0 = arith.constant 0 : i32
    return %c0_i32, %arg1 : i32, i32
  }
  func.func @transform_3(%arg0: i32, %arg1: i32, %arg2: i32) -> (i32, i32) {
    %c0_i32 = arith.constant 0 : i32
    return %arg0, %arg1 : i32, i32
  }
}

</mosaic_0001>

<llo_original>
// kernel: linear_forward.1
$region0: #{linear_forward.1}
  #allocation0 [shape = 'u32[]', space=smem, size = 0x4, offset = 0x4, fixed_abs, tag = 'smem constant byte address 0x4 - core index']
  #allocation1 [shape = 'u32[144,128]{1,0:T(1,128)}', space=vmem, size = 0x12000, scoped, tag = 'internal scratch']
  #allocation2 [shape = 'f32[8,128]{1,0:T(8,128)}', space=vmem, size = 0x1000, scoped, tag = 'scratch operand']
  %s0 = inlined_call_operand.vmem [shape: f32[8,128], index: 0, kind: input, shape index: {}]
  %s1 = inlined_call_operand.vmem [shape: f32[128,128], index: 1, kind: input, shape index: {}]
  %s2 = inlined_call_operand.vmem [shape: f32[1,128], index: 2, kind: input, shape index: {}]
  %s3 = inlined_call_operand.vmem [shape: f32[8,128], index: 3, kind: output, shape index: {}]
  %s4 = sld [smem:[#allocation0]]
  $region30: #{linear_forward.1} parent=0
    _
  %s6 = ssub.s32 1, %s4
  %s7 = scalar_select 0, %s6, %s4
  // Predicated region
  $region2: #{linear_forward.1} parent=0 // pred_check
    _
  $region3: #{linear_forward.1} parent=0 // pred_check_branch
    %9 = sbr.rel (0) target = $region5
  $region4: #{linear_forward.1} parent=0 // pred_region
    _
  $region5: #{linear_forward.1} parent=0 // pred_fallthru
    _
  // Predicated region
  $region6: #{linear_forward.1} parent=0 // pred_check
    _
  $region7: #{linear_forward.1} parent=0 // pred_check_branch
    %11 = sbr.rel (0) target = $region9
  $region8: #{linear_forward.1} parent=0 // pred_region
    _
  $region9: #{linear_forward.1} parent=0 // pred_fallthru
    _
  // Predicated region
  $region10: #{linear_forward.1} parent=0 // pred_check
    _
  $region11: #{linear_forward.1} parent=0 // pred_check_branch
    %13 = sbr.rel (0) target = $region13
  $region12: #{linear_forward.1} parent=0 // pred_region
    _
  $region13: #{linear_forward.1} parent=0 // pred_fallthru
    _
  %p14 = scmp.eq.s32.totalorder 0, 0
  // Predicated region
  $region14: #{linear_forward.1} parent=0 // pred_check
    %p15 = pneg %p14
  $region15: #{linear_forward.1} parent=0 // pred_check_branch
    %17 = sbr.rel (%p15) target = $region17
  $region16: #{linear_forward.1} parent=0 // pred_region
    %v18 = vld [vmem:[%s2] sm:$0x1]
    %v20 = vlaneseq
    %v21 = vshrl.u32 %v20, 7
    %v22 = vsub.s32 0, %v21
    %v23 = vrot.slane %v18, %v22
    %25 = vst [vmem:[#allocation2] sm:$0xff] %v23
  $region17: #{linear_forward.1} parent=0 // pred_fallthru
    _
  %v26 = vld [vmem:[#allocation2] sm:$0xff]
  %v27 = vld [vmem:[%s0] sm:$0xff]
  %v28 = vld [vmem:[%s1] sm:$0xff]
  %v29 = vld [vmem:[%s1 + $0x8] sm:$0xff]
  %v30 = vld [vmem:[%s1 + $0x10] sm:$0xff]
  %v31 = vld [vmem:[%s1 + $0x18] sm:$0xff]
  %v32 = vld [vmem:[%s1 + $0x20] sm:$0xff]
  %v33 = vld [vmem:[%s1 + $0x28] sm:$0xff]
  %v34 = vld [vmem:[%s1 + $0x30] sm:$0xff]
  %v35 = vld [vmem:[%s1 + $0x38] sm:$0xff]
  %v36 = vld [vmem:[%s1 + $0x40] sm:$0xff]
  %v37 = vld [vmem:[%s1 + $0x48] sm:$0xff]
  %v38 = vld [vmem:[%s1 + $0x50] sm:$0xff]
  %v39 = vld [vmem:[%s1 + $0x58] sm:$0xff]
  %v40 = vld [vmem:[%s1 + $0x60] sm:$0xff]
  %v41 = vld [vmem:[%s1 + $0x68] sm:$0xff]
  %v42 = vld [vmem:[%s1 + $0x70] sm:$0xff]
  %v43 = vld [vmem:[%s1 + $0x78] sm:$0xff]
  %44 = vmatprep.subr.mxu0 0.0
  %45 = vmatpush1.xpose.msra.mxu0 %v43
  %46 = vmatprep.subr.mxu0 0.0
  %47 = vmatpush1.xpose.msra.mxu0 %v42
  %48 = vmatprep.subr.mxu0 0.0
  %49 = vmatpush1.xpose.msra.mxu0 %v41
  %50 = vmatprep.subr.mxu0 0.0
  %51 = vmatpush1.xpose.msra.mxu0 %v40
  %52 = vmatprep.subr.mxu0 0.0
  %53 = vmatpush1.xpose.msra.mxu0 %v39
  %54 = vmatprep.subr.mxu0 0.0
  %55 = vmatpush1.xpose.msra.mxu0 %v38
  %56 = vmatprep.subr.mxu0 0.0
  %57 = vmatpush1.xpose.msra.mxu0 %v37
  %58 = vmatprep.subr.mxu0 0.0
  %59 = vmatpush1.xpose.msra.mxu0 %v36
  %60 = vmatprep.subr.mxu0 0.0
  %61 = vmatpush1.xpose.msra.mxu0 %v35
  %62 = vmatprep.subr.mxu0 0.0
  %63 = vmatpush1.xpose.msra.mxu0 %v34
  %64 = vmatprep.subr.mxu0 0.0
  %65 = vmatpush1.xpose.msra.mxu0 %v33
  %66 = vmatprep.subr.mxu0 0.0
  %67 = vmatpush1.xpose.msra.mxu0 %v32
  %68 = vmatprep.subr.mxu0 0.0
  %69 = vmatpush1.xpose.msra.mxu0 %v31
  %70 = vmatprep.subr.mxu0 0.0
  %71 = vmatpush1.xpose.msra.mxu0 %v30
  %72 = vmatprep.subr.mxu0 0.0
  %73 = vmatpush1.xpose.msra.mxu0 %v29
  %74 = vmatprep.subr.mxu0 0.0
  %75 = vmatpush1.xpose.msra.mxu0 %v28
  %76 = vmatprep.subr.mxu0 0.0
  %77 = vmatpush2.xpose.msra.mxu0 0.0
  %78 = vmatprep.subr.mxu0 0.0
  %79 = vmatpush2.xpose.msra.mxu0 0.0
  %80 = vmatprep.subr.mxu0 0.0
  %81 = vmatpush2.xpose.msra.mxu0 0.0
  %82 = vmatprep.subr.mxu0 0.0
  %83 = vmatpush2.xpose.msra.mxu0 0.0
  %84 = vmatprep.subr.mxu0 0.0
  %85 = vmatpush2.xpose.msra.mxu0 0.0
  %86 = vmatprep.subr.mxu0 0.0
  %87 = vmatpush2.xpose.msra.mxu0 0.0
  %88 = vmatprep.subr.mxu0 0.0
  %89 = vmatpush2.xpose.msra.mxu0 0.0
  %90 = vmatprep.subr.mxu0 0.0
  %91 = vmatpush2.xpose.msra.mxu0 0.0
  %92 = vmatprep.subr.mxu0 0.0
  %93 = vmatpush2.xpose.msra.mxu0 0.0
  %94 = vmatprep.subr.mxu0 0.0
  %95 = vmatpush2.xpose.msra.mxu0 0.0
  %96 = vmatprep.subr.mxu0 0.0
  %97 = vmatpush2.xpose.msra.mxu0 0.0
  %98 = vmatprep.subr.mxu0 0.0
  %99 = vmatpush2.xpose.msra.mxu0 0.0
  %100 = vmatprep.subr.mxu0 0.0
  %101 = vmatpush2.xpose.msra.mxu0 0.0
  %102 = vmatprep.subr.mxu0 0.0
  %103 = vmatpush2.xpose.msra.mxu0 0.0
  %104 = vmatprep.subr.mxu0 0.0
  %105 = vmatpush2.xpose.msra.mxu0 0.0
  %106 = vmatprep.subr.mxu0 0.0
  %107 = vmatpush2.xpose.msra.mxu0 0.0
  %108 = vmatprep.mubr.f32.mxu0 0.0
  %109 = vmatmul.mubr.f32.gmra.mxu0 %v27
  %v110 = vpop.f32.mrf.mxu0
  %v111 = vadd.f32 0.0, %v110
  %v112 = vpop.f32.mrf.mxu0
  %113 = vdwg.mxu0
  %v114 = vadd.f32 %v26, %v111
  %115 = vst [vmem:[#allocation2] sm:$0xff] %v114
  // Predicated region
  $region18: #{linear_forward.1} parent=0 // pred_check
    %p116 = pneg %p14
  $region19: #{linear_forward.1} parent=0 // pred_check_branch
    %118 = sbr.rel (%p116) target = $region21
  $region20: #{linear_forward.1} parent=0 // pred_region
    %v119 = vld [vmem:[#allocation2] sm:$0xff]
    %120 = vst [vmem:[%s3] sm:$0xff] %v119
  $region21: #{linear_forward.1} parent=0 // pred_fallthru
    _
  // Predicated region
  $region22: #{linear_forward.1} parent=0 // pred_check
    _
  $region23: #{linear_forward.1} parent=0 // pred_check_branch
    %122 = sbr.rel (0) target = $region25
  $region24: #{linear_forward.1} parent=0 // pred_region
    _
  $region25: #{linear_forward.1} parent=0 // pred_fallthru
    _
  // Predicated region
  $region26: #{linear_forward.1} parent=0 // pred_check
    _
  $region27: #{linear_forward.1} parent=0 // pred_check_branch
    %124 = sbr.rel (0) target = $region29
  $region28: #{linear_forward.1} parent=0 // pred_region
    _
  $region29: #{linear_forward.1} parent=0 // pred_fallthru
    _

</llo_original>
